<compile_context>
chip_gen: v5e
topology: v5e:2x2
jax: 0.10.0
libtpu: 0.0.40
codegen_flags: <defaults>
</compile_context>

<pallas_src>
import functools

import jax
import jax.numpy as jnp
from jax import lax
from jax.experimental import pallas as pl
from jax.experimental.pallas import tpu as pltpu

EPS = 1e-5


def _round_up(x, m):
    return ((x + m - 1) // m) * m


def _cdiv(a, b):
    return -(-a // b)


# --------------------------------------------------------------------------- #
# Kernels
# --------------------------------------------------------------------------- #
def _stats_kernel(patch_ref, rowsum_ref, gram_ref):
    """Pass 1 (pure streaming read of the patch): per-tile column sums (K,)
    and Gram matrix G = patch^T @ patch (K x K, f32 accumulation). Per-channel
    BatchNorm sum / sum-of-squares are derived from these in tiny XLA
    afterwards, so no (tm, C4) conv output is materialized in this pass."""
    p = patch_ref[...]                                             # (tm, K) bf16
    rowsum_ref[...] = jnp.sum(p.astype(jnp.float32), axis=0,
                              keepdims=True)[None]                 # (1, 1, K)
    gram_ref[...] = lax.dot_general(
        p, p, dimension_numbers=(((0,), (0,)), ((), ())),
        preferred_element_type=jnp.float32)[None]                  # (1, K, K)


def _norm_kernel(patch_ref, w_ref, scale_ref, shift_ref, out_ref):
    """Pass 2: fused conv matmul -> folded BN affine (x*scale + shift) -> ReLU,
    lane-dense (bf16 by default) store."""
    acc = jnp.dot(patch_ref[...], w_ref[...],
                  preferred_element_type=jnp.float32)              # (tm, C4) f32
    y = jnp.maximum(acc * scale_ref[...] + shift_ref[...], 0.0)
    out_ref[...] = y.astype(out_ref.dtype)


# --------------------------------------------------------------------------- #
# Wrapper glue
# --------------------------------------------------------------------------- #
def _build_phase_weights(w, c4):
    """w: (Cin, Cout, 3, 3) ConvTranspose2d weight -> W_big: (4*Cin, c4).

    Row group  t = 2*dr + dc multiplies the input tap x[r+dr, c+dc];
    column p*Cout + ch produces output sub-pixel (2r+dh, 2c+dw) with
    p = 2*dh + dw. Only the 9 (tap, phase) pairs a stride-2 k=3 ConvTranspose
    uses are non-zero; columns [4*Cout, c4) are zero padding (joint padding,
    not per-phase)."""
    cin, cout = w.shape[0], w.shape[1]
    wb = jnp.zeros((4, cin, c4), jnp.float32)
    taps = [
        (0, 0, 1, 1),                                            # even h, even w
        (0, 1, 1, 2), (1, 1, 1, 0),                              # even h, odd  w
        (0, 2, 2, 1), (2, 2, 0, 1),                              # odd  h, even w
        (0, 3, 2, 2), (1, 3, 2, 0), (2, 3, 0, 2), (3, 3, 0, 0),  # odd  h, odd  w
    ]
    for t, p, kh, kw in taps:
        wb = wb.at[t, :, p * cout:(p + 1) * cout].set(w[:, :, kh, kw])
    return wb.reshape(4 * cin, c4)


@functools.lru_cache(maxsize=None)
def _vmem_limit_bytes():
    """Generation-aware scoped VMEM limit: <= ~48 MiB on v7x (64 MiB physical),
    64 MiB on v5e/v6e (128 MiB physical)."""
    cap = 128 * 1024 * 1024
    try:
        cap = int(getattr(pltpu.get_tpu_info(), "vmem_capacity_bytes", cap))
    except Exception:
        pass
    return int(min(64 * 1024 * 1024, (cap * 3) // 4))


@functools.partial(
    jax.jit, static_argnames=("block_rows", "nhwc_in", "nhwc_out", "out_dtype"))
def decoder_block_forward(x, w, b, gamma, beta, *, block_rows=1024,
                          nhwc_in=False, nhwc_out=False,
                          out_dtype=jnp.bfloat16):
    """x: (N, Cin, H, W) NCHW (or (N, H, W, Cin) if nhwc_in).
    Returns (N, Cout, 2H, 2W) NCHW (or (N, 2H, 2W, Cout) if nhwc_out)."""
    # ConvTranspose bias is accepted for API parity but mathematically a no-op
    # under training-mode BatchNorm (cancelled by the mean subtraction).
    # TODO(synk): BatchNorm running_mean/running_var momentum updates (training
    # side effect, not part of the returned tensor) are not tracked; if added,
    # the bias must be re-included in the tracked batch mean.
    del b
    if nhwc_in:
        N, H, W, Cin = x.shape
        x_nhwc = x.astype(jnp.float32)
    else:
        N, Cin, H, W = x.shape
        x_nhwc = jnp.transpose(x, (0, 2, 3, 1)).astype(jnp.float32)
    Cout = w.shape[1]
    C4 = _round_up(4 * Cout, 128)          # joint phase padding (not per-phase)
    K = 4 * Cin
    M = N * H * W
    out_bytes = jnp.dtype(out_dtype).itemsize

    # glue: compact 2x2-window im2col patch (no zero-inserted/dilated input).
    # Tap order along channels is t = 2*dr + dc.
    xp = jnp.pad(x_nhwc, ((0, 0), (0, 1), (0, 1), (0, 0)))        # zero row/col
    patch = jnp.concatenate(
        [xp[:, :H, :W, :], xp[:, :H, 1:W + 1, :],
         xp[:, 1:H + 1, :W, :], xp[:, 1:H + 1, 1:W + 1, :]], axis=-1)
    patch = patch.reshape(M, K).astype(jnp.bfloat16)

    # ---- grid sizing: >=2 balanced tiles (v7x megacore), VMEM-fitted tiles ---
    vmem_limit = _vmem_limit_bytes()
    T = max(1, _cdiv(M, block_rows))
    if M > 16:
        T = max(T, 2)                      # both v7x TensorCores get work
    if T > 1 and T % 2:
        T += 1                             # balanced across 2 cores
    tm = max(16, _round_up(_cdiv(M, T), 16))
    while tm > 16:                         # fit pass-2 double-buffered footprint
        est = (2 * tm * K * 2) + (2 * K * C4 * 2) + (2 * tm * C4 * out_bytes) \
              + (tm * C4 * 4) + 4 * C4 * 4
        if est <= (vmem_limit * 3) // 4:
            break
        tm = max(16, _round_up(tm // 2, 16))
    T = _cdiv(M, tm)
    Mp = T * tm
    if Mp > M:   # zero rows contribute nothing to rowsum/Gram; sliced off below
        patch = jnp.pad(patch, ((0, Mp - M), (0, 0)))

    w_big = _build_phase_weights(w.astype(jnp.float32), C4).astype(jnp.bfloat16)

    cparams = pltpu.CompilerParams(
        dimension_semantics=("parallel",),
        vmem_limit_bytes=vmem_limit)

    # ---- pass 1: streaming patch read -> per-tile rowsum + Gram matrix ------
    part_rowsum, part_gram = pl.pallas_call(
        _stats_kernel,
        out_shape=(jax.ShapeDtypeStruct((T, 1, K), jnp.float32),
                   jax.ShapeDtypeStruct((T, K, K), jnp.float32)),
        grid=(T,),
        in_specs=[pl.BlockSpec((tm, K), lambda i: (i, 0))],
        out_specs=[pl.BlockSpec((1, 1, K), lambda i: (i, 0, 0)),
                   pl.BlockSpec((1, K, K), lambda i: (i, 0, 0))],
        compiler_params=cparams,
        cost_estimate=pl.CostEstimate(
            flops=2 * Mp * K * K + Mp * K, transcendentals=0,
            bytes_accessed=Mp * K * 2 + T * (K + K * K) * 4),
    )(patch)

    # ---- tiny XLA reduction: Gram -> per-channel mean/var -> scale/shift ----
    rowsum = jnp.sum(part_rowsum, axis=(0, 1))                    # (K,)
    gram = jnp.sum(part_gram, axis=0)                             # (K, K)
    w32 = w_big.astype(jnp.float32)                               # (K, C4)
    count = jnp.float32(4 * M)                                    # N*2H*2W pixels
    sum_c4 = rowsum @ w32                                         # (C4,)
    sq_c4 = jnp.einsum('kc,kl,lc->c', w32, gram, w32)             # (C4,)
    s = sum_c4[:4 * Cout].reshape(4, Cout).sum(axis=0)
    sq = sq_c4[:4 * Cout].reshape(4, Cout).sum(axis=0)
    mean = s / count
    # Single-pass (E[x^2]-E[x]^2) batch variance in f32; clamped at 0.
    # TODO(synk): shifted / Welford-style combine if this feeds large-batch training.
    var = jnp.maximum(sq / count - mean * mean, 0.0)
    scale = gamma.astype(jnp.float32) * lax.rsqrt(var + EPS)
    shift = beta.astype(jnp.float32) - mean * scale
    pad = C4 - 4 * Cout
    scale4 = jnp.pad(jnp.tile(scale, 4), (0, pad))[None, :]       # (1, C4)
    shift4 = jnp.pad(jnp.tile(shift, 4), (0, pad))[None, :]

    # ---- pass 2: conv recompute -> BN affine -> ReLU -> bf16 store ----------
    out_flat = pl.pallas_call(
        _norm_kernel,
        out_shape=jax.ShapeDtypeStruct((Mp, C4), out_dtype),
        grid=(T,),
        in_specs=[pl.BlockSpec((tm, K), lambda i: (i, 0)),
                  pl.BlockSpec((K, C4), lambda i: (0, 0)),
                  pl.BlockSpec((1, C4), lambda i: (0, 0)),
                  pl.BlockSpec((1, C4), lambda i: (0, 0))],
        out_specs=pl.BlockSpec((tm, C4), lambda i: (i, 0)),
        compiler_params=cparams,
        cost_estimate=pl.CostEstimate(
            flops=2 * Mp * K * C4 + 3 * Mp * C4, transcendentals=0,
            bytes_accessed=Mp * K * 2 + K * C4 * 2 + Mp * C4 * out_bytes),
    )(patch, w_big, scale4, shift4)

    # glue: de-interleave the 4 sub-pixel phases (columns are p*Cout + c).
    y = out_flat[:M, :4 * Cout].reshape(N, H, W, 2, 2, Cout)
    if nhwc_out:
        y = jnp.transpose(y, (0, 1, 3, 2, 4, 5))        # (N, H, dh, W, dw, C)
        return y.reshape(N, 2 * H, 2 * W, Cout)
    y = jnp.transpose(y, (0, 5, 1, 3, 2, 4))            # (N, C, H, dh, W, dw)
    return y.reshape(N, Cout, 2 * H, 2 * W)


# --------------------------------------------------------------------------- #
# Pure-JAX reference (ConvTranspose2d + BN(train) + ReLU), NCHW
# --------------------------------------------------------------------------- #
def decoder_block_reference(x, w, b, gamma, beta):
    w_oihw = jnp.transpose(w[:, :, ::-1, ::-1], (1, 0, 2, 3))
    y = lax.conv_general_dilated(
        x, w_oihw, window_strides=(1, 1),
        padding=((1, 2), (1, 2)), lhs_dilation=(2, 2), rhs_dilation=(1, 1),
        dimension_numbers=('NCHW', 'OIHW', 'NCHW'),
        precision=lax.Precision.HIGHEST)
    y = y + b[None, :, None, None]
    mean = jnp.mean(y, axis=(0, 2, 3), keepdims=True)
    var = jnp.mean((y - mean) ** 2, axis=(0, 2, 3), keepdims=True)
    y = (y - mean) * lax.rsqrt(var + EPS)
    y = y * gamma[None, :, None, None] + beta[None, :, None, None]
    return jnp.maximum(y, 0.0)


if __name__ == "__main__":
    key = jax.random.PRNGKey(0)
    k_x, k_w, k_b, k_g, k_bt = jax.random.split(key, 5)

    N, Cin, Cout, H, W = 2, 4, 8, 16, 16
    x = jax.random.normal(k_x, (N, Cin, H, W), jnp.float32)
    w = 0.1 * jax.random.normal(k_w, (Cin, Cout, 3, 3), jnp.float32)   # ConvT weight
    b = 0.1 * jax.random.normal(k_b, (Cout,), jnp.float32)             # ConvT bias
    gamma = 1.0 + 0.1 * jax.random.normal(k_g, (Cout,), jnp.float32)   # BN weight
    beta = 0.1 * jax.random.normal(k_bt, (Cout,), jnp.float32)         # BN bias

    # Default block_rows: the wrapper still splits M = N*H*W = 512 rows into
    # T = 2 balanced tiles (v7x megacore) and exercises the cross-tile BN
    # (rowsum / Gram) reduction.
    out = decoder_block_forward(x, w, b, gamma, beta)
    out = jax.block_until_ready(out)
    assert out.shape == (N, Cout, 2 * H, 2 * W), out.shape

    ref = jax.block_until_ready(decoder_block_reference(x, w, b, gamma, beta))
    max_err = float(jnp.max(jnp.abs(out.astype(jnp.float32) - ref)))
    # bf16 MXU inputs + bf16 output store (f32 accumulation / statistics)
    # vs. an all-f32 HIGHEST-precision reference.
    assert max_err < 7.5e-2, f"mismatch vs reference: {max_err}"

    # Channels-last output path (used to chain decoder blocks without the
    # NCHW<->NHWC full-tensor round trip) must agree with the NCHW path.
    out_nhwc = decoder_block_forward(x, w, b, gamma, beta, nhwc_out=True)
    out_nhwc = jax.block_until_ready(out_nhwc)
    assert out_nhwc.shape == (N, 2 * H, 2 * W, Cout), out_nhwc.shape
    layout_err = float(jnp.max(jnp.abs(
        jnp.transpose(out_nhwc, (0, 3, 1, 2)).astype(jnp.float32)
        - out.astype(jnp.float32))))
    assert layout_err < 1e-5, f"NHWC/NCHW layout mismatch: {layout_err}"

    print("KERNEL_OK")
</pallas_src>

<mosaic_0001>
module attributes {stable_mosaic.version = 11 : i64} {
  func.func @_stats_kernel(%arg0: i32, %arg1: memref<256x16xbf16, #tpu.memory_space<vmem>>, %arg2: memref<1x1x16xf32, #tpu.memory_space<vmem>>, %arg3: memref<1x16x16xf32, #tpu.memory_space<vmem>>) attributes {dimension_semantics = [#tpu.dimension_semantics<parallel>], iteration_bounds = array<i64: 2>, scalar_prefetch = 0 : i64, scratch_operands = 0 : i64, tpu.core_type = #tpu.core_type<tc>, window_params = [{transform_indices = @transform_0, window_bounds = array<i64: 256, 16>}, {transform_indices = @transform_1, window_bounds = array<i64: 1, 1, 16>}, {transform_indices = @transform_2, window_bounds = array<i64: 1, 16, 16>}]} {
    %c0 = arith.constant 0 : index
    %c0_0 = arith.constant 0 : index
    %0 = vector.load %arg1[%c0, %c0_0] : memref<256x16xbf16, #tpu.memory_space<vmem>>, vector<256x16xbf16>
    %1 = arith.extf %0 : vector<256x16xbf16> to vector<256x16xf32>
    %cst = arith.constant dense<0.000000e+00> : vector<16xf32>
    %2 = vector.multi_reduction <add>, %1, %cst [0] : vector<256x16xf32> to vector<16xf32>
    %3 = vector.shape_cast %2 : vector<16xf32> to vector<1x16xf32>
    %4 = vector.shape_cast %3 : vector<1x16xf32> to vector<1x1x16xf32>
    %c0_1 = arith.constant 0 : index
    %c0_2 = arith.constant 0 : index
    %c0_3 = arith.constant 0 : index
    %5 = vector.load %arg2[%c0_1, %c0_2, %c0_3] : memref<1x1x16xf32, #tpu.memory_space<vmem>>, vector<1x1x16xf32>
    tpu.vector_store %arg2[%c0_1, %c0_2, %c0_3], %4 {strides = array<i32>} : memref<1x1x16xf32, #tpu.memory_space<vmem>>, vector<1x1x16xf32>,
    %cst_4 = arith.constant dense<0.000000e+00> : vector<16x16xf32>
    %6 = tpu.matmul %0, %0, %cst_4 {dimension_numbers = #tpu.dot_dimension_numbers<[0], [0], [1], [1], [0, 1, 1, 1], [], []>} : vector<256x16xbf16>, vector<256x16xbf16>, vector<16x16xf32> -> vector<16x16xf32>
    %7 = vector.shape_cast %6 : vector<16x16xf32> to vector<1x16x16xf32>
    %c0_5 = arith.constant 0 : index
    %c0_6 = arith.constant 0 : index
    %c0_7 = arith.constant 0 : index
    %8 = vector.load %arg3[%c0_5, %c0_6, %c0_7] : memref<1x16x16xf32, #tpu.memory_space<vmem>>, vector<1x16x16xf32>
    tpu.vector_store %arg3[%c0_5, %c0_6, %c0_7], %7 {strides = array<i32>} : memref<1x16x16xf32, #tpu.memory_space<vmem>>, vector<1x16x16xf32>,
    return
  }
  func.func @transform_0(%arg0: i32) -> (i32, i32) {
    %c0_i32 = arith.constant 0 : i32
    %c0_i32_0 = arith.constant 0 : i32
    return %arg0, %c0_i32 : i32, i32
  }
  func.func @transform_1(%arg0: i32) -> (i32, i32, i32) {
    %c0_i32 = arith.constant 0 : i32
    %c0_i32_0 = arith.constant 0 : i32
    %c0_i32_1 = arith.constant 0 : i32
    return %arg0, %c0_i32, %c0_i32_0 : i32, i32, i32
  }
  func.func @transform_2(%arg0: i32) -> (i32, i32, i32) {
    %c0_i32 = arith.constant 0 : i32
    %c0_i32_0 = arith.constant 0 : i32
    %c0_i32_1 = arith.constant 0 : i32
    return %arg0, %c0_i32, %c0_i32_0 : i32, i32, i32
  }
}

module attributes {stable_mosaic.version = 11 : i64} {
  func.func @_norm_kernel(%arg0: i32, %arg1: memref<256x16xbf16, #tpu.memory_space<vmem>>, %arg2: memref<16x128xbf16, #tpu.memory_space<vmem>>, %arg3: memref<1x128xf32, #tpu.memory_space<vmem>>, %arg4: memref<1x128xf32, #tpu.memory_space<vmem>>, %arg5: memref<256x128xbf16, #tpu.memory_space<vmem>>) attributes {dimension_semantics = [#tpu.dimension_semantics<parallel>], iteration_bounds = array<i64: 2>, scalar_prefetch = 0 : i64, scratch_operands = 0 : i64, tpu.core_type = #tpu.core_type<tc>, window_params = [{transform_indices = @transform_0, window_bounds = array<i64: 256, 16>}, {pipeline_mode = #tpu.pipeline_mode<synchronous>, transform_indices = @transform_1, window_bounds = array<i64: 16, 128>}, {pipeline_mode = #tpu.pipeline_mode<synchronous>, transform_indices = @transform_2, window_bounds = array<i64: 1, 128>}, {pipeline_mode = #tpu.pipeline_mode<synchronous>, transform_indices = @transform_3, window_bounds = array<i64: 1, 128>}, {transform_indices = @transform_4, window_bounds = array<i64: 256, 128>}]} {
    %c0 = arith.constant 0 : index
    %c0_0 = arith.constant 0 : index
    %0 = vector.load %arg1[%c0, %c0_0] : memref<256x16xbf16, #tpu.memory_space<vmem>>, vector<256x16xbf16>
    %c0_1 = arith.constant 0 : index
    %c0_2 = arith.constant 0 : index
    %1 = vector.load %arg2[%c0_1, %c0_2] : memref<16x128xbf16, #tpu.memory_space<vmem>>, vector<16x128xbf16>
    %cst = arith.constant dense<0.000000e+00> : vector<256x128xf32>
    %2 = tpu.matmul %0, %1, %cst {dimension_numbers = #tpu.dot_dimension_numbers<[1], [0], [0], [1], [0, 0, 1, 1], [], []>} : vector<256x16xbf16>, vector<16x128xbf16>, vector<256x128xf32> -> vector<256x128xf32>
    %c0_3 = arith.constant 0 : index
    %c0_4 = arith.constant 0 : index
    %3 = vector.load %arg3[%c0_3, %c0_4] : memref<1x128xf32, #tpu.memory_space<vmem>>, vector<1x128xf32>
    %4 = vector.broadcast %3 : vector<1x128xf32> to vector<256x128xf32>
    %5 = arith.mulf %2, %4 : vector<256x128xf32>
    %c0_5 = arith.constant 0 : index
    %c0_6 = arith.constant 0 : index
    %6 = vector.load %arg4[%c0_5, %c0_6] : memref<1x128xf32, #tpu.memory_space<vmem>>, vector<1x128xf32>
    %7 = vector.broadcast %6 : vector<1x128xf32> to vector<256x128xf32>
    %8 = arith.addf %5, %7 : vector<256x128xf32>
    %cst_7 = arith.constant 0.000000e+00 : f32
    %9 = vector.broadcast %cst_7 : f32 to vector<256x128xf32>
    %10 = arith.maximumf %8, %9 : vector<256x128xf32>
    %11 = arith.truncf %10 : vector<256x128xf32> to vector<256x128xbf16>
    %c0_8 = arith.constant 0 : index
    %c0_9 = arith.constant 0 : index
    %12 = vector.load %arg5[%c0_8, %c0_9] : memref<256x128xbf16, #tpu.memory_space<vmem>>, vector<256x128xbf16>
    tpu.vector_store %arg5[%c0_8, %c0_9], %11 {strides = array<i32>} : memref<256x128xbf16, #tpu.memory_space<vmem>>, vector<256x128xbf16>,
    return
  }
  func.func @transform_0(%arg0: i32) -> (i32, i32) {
    %c0_i32 = arith.constant 0 : i32
    %c0_i32_0 = arith.constant 0 : i32
    return %arg0, %c0_i32 : i32, i32
  }
  func.func @transform_1(%arg0: i32) -> (i32, i32) {
    %c0_i32 = arith.constant 0 : i32
    %c0_i32_0 = arith.constant 0 : i32
    %c0_i32_1 = arith.constant 0 : i32
    return %c0_i32, %c0_i32_0 : i32, i32
  }
  func.func @transform_2(%arg0: i32) -> (i32, i32) {
    %c0_i32 = arith.constant 0 : i32
    %c0_i32_0 = arith.constant 0 : i32
    %c0_i32_1 = arith.constant 0 : i32
    return %c0_i32, %c0_i32_0 : i32, i32
  }
  func.func @transform_3(%arg0: i32) -> (i32, i32) {
    %c0_i32 = arith.constant 0 : i32
    %c0_i32_0 = arith.constant 0 : i32
    %c0_i32_1 = arith.constant 0 : i32
    return %c0_i32, %c0_i32_0 : i32, i32
  }
  func.func @transform_4(%arg0: i32) -> (i32, i32) {
    %c0_i32 = arith.constant 0 : i32
    %c0_i32_0 = arith.constant 0 : i32
    return %arg0, %c0_i32 : i32, i32
  }
}

</mosaic_0001>

<llo_original>
// kernel: tile.18
$region0: #{tile.18}
  #allocation0 [shape = 's32[1]{0}', space=sflag, size = 0x4, scoped, tag = 'scoped memory for tile.18']
  %s0 = inlined_call_operand.vmem [shape: f32[8], index: 0, kind: input, shape index: {}]
  %s1 = inlined_call_operand.vmem [shape: f32[4,8], index: 1, kind: output, shape index: {}]
  // Predicated region
  $region2: #{tile.18} parent=0 // pred_check
    _
  $region3: #{tile.18} parent=0 // pred_check_branch
    %3 = sbr.rel (0) target = $region5
  $region4: #{tile.18} parent=0 // pred_region
    _
  $region5: #{tile.18} parent=0 // pred_fallthru
    _
  %v4 = vld [vmem:[%s0] ss:$0 sm:$0xff]
  %5 = vst [vmem:[%s1] sm:$0xf] %v4

// kernel: tile.19
$region0: #{tile.19}
  %s0 = inlined_call_operand.vmem [shape: f32[4,8], index: 0, kind: input, shape index: {}]
  %s1 = inlined_call_operand.vmem [shape: f32[32], index: 1, kind: output, shape index: {}]
  $region1: #{tile.19} parent=0
    #allocation0 [shape = 'u8[4096]{0}', space=vmem, size = 0x1000, scoped, tag = 'scoped mem for output reshape']
    #allocation1 [shape = 'u8[4096]{0}', space=vmem, size = 0x1000, scoped, tag = 'scoped mem for input reshape']
    %s3 = ssub.s32 16, 1
    %v4 = vld [vmem:[%s0] sm:%s3]
    %5 = vst [vmem:[#allocation1] sm:%s3] %v4
    %v6 = vld [vmem:[#allocation1] sm:$0x1]
    %vm7 = vcmask 64512
    %8 = vst.msk [vmem:[#allocation0] sm:$0x1] %vm7, %v6
    %s9 = scalar_lea.vmem [#allocation1], 3
    %v10 = vld [vmem:[%s9] sm:$0x1]
    %11 = vrot.lane.b32.xlu0 %v10, 24
    %v12 = vpop.permute.xlu0 %11
    %vm13 = vcmask 261312
    %14 = vst.msk [vmem:[#allocation0] sm:$0x1] %vm13, %v12
    %s15 = scalar_lea.vmem [#allocation1], 2
    %v16 = vld [vmem:[%s15] sm:$0x1]
    %17 = vrot.lane.b32.xlu0 %v16, 16
    %v18 = vpop.permute.xlu0 %17
    %vm19 = vcmask 195712
    %20 = vst.msk [vmem:[#allocation0] sm:$0x1] %vm19, %v18
    %s21 = scalar_lea.vmem [#allocation1], 1
    %v22 = vld [vmem:[%s21] sm:$0x1]
    %23 = vrot.lane.b32.xlu0 %v22, 8
    %v24 = vpop.permute.xlu0 %23
    %vm25 = vcmask 130112
    %26 = vst.msk [vmem:[#allocation0] sm:$0x1] %vm25, %v24
    %s28 = ssub.s32 2, 1
    %v29 = vld [vmem:[#allocation0] sm:%s28]
    %s31 = ssub.s32 2, 1
    %32 = vst [vmem:[%s1] sm:%s31] %v29

// kernel: decoder_block_forward.2
$region0: #{decoder_block_forward.2}
  #allocation0 [shape = 'u32[]', space=smem, size = 0x4, offset = 0x4, fixed_abs, tag = 'smem constant byte address 0x4 - core index']
  #allocation1 [shape = 'u32[72,128]{1,0:T(1,128)}', space=vmem, size = 0x9000, scoped, tag = 'internal scratch']
  %s0 = inlined_call_operand.vmem [shape: bf16[512,16], index: 0, kind: input, shape index: {}]
  %s1 = inlined_call_operand.vmem [shape: f32[2,1,16], index: 1, kind: output, shape index: {0}]
  %s2 = inlined_call_operand.vmem [shape: f32[2,16,16], index: 2, kind: output, shape index: {1}]
  %3 = xla_tuple %s1, %s2
  %s4 = sld [smem:[#allocation0]]
  $region45: #{decoder_block_forward.2} parent=0
    _
  %s6 = ssub.s32 1, %s4
  %s7 = scalar_select 0, %s6, %s4
  loop: start=0, step=1, limit=4
  $region2: #{decoder_block_forward.2} parent=0 // loop_pre_header
    _
  $region3: #{decoder_block_forward.2} parent=0 // loop_header
    %s9 = sphi 0, %s13
    %p10 = scmp.ge.s32.totalorder %s9, 4
    %s19 = sphi 0, %s21
    %s22 = sphi 0, %s19
    %s23 = sphi 0, %s22
    %s39 = sphi 0, %s23
    %s45 = sphi 0, %s47
    %s48 = sphi 0, %s45
    %s49 = sphi 0, %s48
    %s65 = sphi 0, %s49
    %s71 = sphi 0, %s73
    %s74 = sphi 0, %s71
    %s75 = sphi 0, %s74
    %s91 = sphi 0, %s75
  $region4: #{decoder_block_forward.2} parent=0 // loop_header_branch
    %12 = sbr.rel (%p10) target = $region8
  $region5: #{decoder_block_forward.2} parent=0 // loop_body
    %s14 = ssub.s32 %s9, 1
    %s15 = ssub.s32 %s9, 2
    %s16 = sadd.s32 %s9, 1
    %s17 = ssub.s32 %s9, %s16
    %p18 = scmp.eq.s32.totalorder %s17, 0
    %s20 = sadd.s32 %s19, 1
    %s21 = scalar_select %p18, %s19, %s20
    %p24 = pneg %p18
    %p25 = scmp.eq.s32.totalorder %s9, 1
    %p26 = por %p24, %p25
    %p27 = scmp.ne.s32.totalorder %s19, %s22
    %p28 = scmp.eq.s32.totalorder %s9, 0
    %p29 = por %p27, %p28
    %p30 = scmp.ne.s32.totalorder %s19, %s22
    %p31 = scmp.eq.s32.totalorder %s14, 1
    %p32 = por %p30, %p31
    %p33 = scmp.ne.s32.totalorder %s22, %s23
    %p34 = scmp.eq.s32.totalorder %s14, 0
    %p35 = por %p33, %p34
    %p36 = scmp.ne.s32.totalorder %s22, %s23
    %p37 = scmp.eq.s32.totalorder %s15, 1
    %p38 = por %p36, %p37
    %p40 = scmp.ne.s32.totalorder %s23, %s39
    %p41 = scmp.eq.s32.totalorder %s15, 0
    %p42 = por %p40, %p41
    %s43 = ssub.s32 %s9, %s16
    %p44 = scmp.eq.s32.totalorder %s43, 0
    %s46 = sadd.s32 %s45, 1
    %s47 = scalar_select %p44, %s45, %s46
    %p50 = pneg %p44
    %p51 = scmp.eq.s32.totalorder %s9, 1
    %p52 = por %p50, %p51
    %p53 = scmp.ne.s32.totalorder %s45, %s48
    %p54 = scmp.eq.s32.totalorder %s9, 0
    %p55 = por %p53, %p54
    %p56 = scmp.ne.s32.totalorder %s45, %s48
    %p57 = scmp.eq.s32.totalorder %s14, 1
    %p58 = por %p56, %p57
    %p59 = scmp.ne.s32.totalorder %s48, %s49
    %p60 = scmp.eq.s32.totalorder %s14, 0
    %p61 = por %p59, %p60
    %p62 = scmp.ne.s32.totalorder %s48, %s49
    %p63 = scmp.eq.s32.totalorder %s15, 1
    %p64 = por %p62, %p63
    %p66 = scmp.ne.s32.totalorder %s49, %s65
    %p67 = scmp.eq.s32.totalorder %s15, 0
    %p68 = por %p66, %p67
    %s69 = ssub.s32 %s9, %s16
    %p70 = scmp.eq.s32.totalorder %s69, 0
    %s72 = sadd.s32 %s71, 1
    %s73 = scalar_select %p70, %s71, %s72
    %p76 = pneg %p70
    %p77 = scmp.eq.s32.totalorder %s9, 1
    %p78 = por %p76, %p77
    %p79 = scmp.ne.s32.totalorder %s71, %s74
    %p80 = scmp.eq.s32.totalorder %s9, 0
    %p81 = por %p79, %p80
    %p82 = scmp.ne.s32.totalorder %s71, %s74
    %p83 = scmp.eq.s32.totalorder %s14, 1
    %p84 = por %p82, %p83
    %p85 = scmp.ne.s32.totalorder %s74, %s75
    %p86 = scmp.eq.s32.totalorder %s14, 0
    %p87 = por %p85, %p86
    %p88 = scmp.ne.s32.totalorder %s74, %s75
    %p89 = scmp.eq.s32.totalorder %s15, 1
    %p90 = por %p88, %p89
    %p92 = scmp.ne.s32.totalorder %s75, %s91
    %p93 = scmp.eq.s32.totalorder %s15, 0
    %p94 = por %p92, %p93
    %p95 = scmp.le.s32.totalorder 1, %s9
    %p96 = scmp.lt.s32.totalorder %s9, 3
    %p97 = pnand %p95, %p96
    %p98 = pneg %p97
    // Predicated region
    $region9: #{decoder_block_forward.2} parent=5 // pred_check
      _
    $region10: #{decoder_block_forward.2} parent=5 // pred_check_branch
      %100 = sbr.rel (%p97) target = $region12
    $region11: #{decoder_block_forward.2} parent=5 // pred_region
      %s101 = ssub.s32 %s9, 1
    $region12: #{decoder_block_forward.2} parent=5 // pred_fallthru
      _
    %p102 = scmp.lt.s32.totalorder %s9, 2
    // Predicated region
    $region13: #{decoder_block_forward.2} parent=5 // pred_check
      %p103 = pneg %p102
    $region14: #{decoder_block_forward.2} parent=5 // pred_check_branch
      %105 = sbr.rel (%p103) target = $region16
    $region15: #{decoder_block_forward.2} parent=5 // pred_region
      // Predicated region
      $region17: #{decoder_block_forward.2} parent=15 // pred_check
        %p106 = pneg %p29
      $region18: #{decoder_block_forward.2} parent=15 // pred_check_branch
        %108 = sbr.rel (%p106) target = $region20
      $region19: #{decoder_block_forward.2} parent=15 // pred_region
        %s109 = smul.u32 32, %s9
        %p110 = scmp.lt.s32.totalorder %s109, 63
        %s111 = scalar_select %p110, %s109, 63
        %s112 = smul.addr %s111, 4
        %s113 = scalar_lea.vmem %s0, %s112
        %s114 = smul.u32 32, %s9
      $region20: #{decoder_block_forward.2} parent=15 // pred_fallthru
        _
    $region16: #{decoder_block_forward.2} parent=5 // pred_fallthru
      _
    %p115 = scmp.le.s32.totalorder 1, %s9
    %p116 = scmp.lt.s32.totalorder %s9, 3
    %p117 = pnand %p115, %p116
    %p118 = pneg %p117
    // Predicated region
    $region21: #{decoder_block_forward.2} parent=5 // pred_check
      _
    $region22: #{decoder_block_forward.2} parent=5 // pred_check_branch
      %120 = sbr.rel (%p117) target = $region24
    $region23: #{decoder_block_forward.2} parent=5 // pred_region
      %s121 = ssub.s32 %s9, 1
      %s122 = smul.u32 32, %s14
      %p123 = scmp.lt.s32.totalorder %s122, 63
      %s124 = scalar_select %p123, %s122, 63
      %s125 = smul.addr %s124, 4
      %s126 = scalar_lea.vmem %s0, %s125
      %p127 = pneg %p35
      %p128 = pneg %p32
      %p129 = pneg %p61
      %p130 = pneg %p58
      %p131 = scmp.lt.s32.totalorder %s14, 1
      %s132 = scalar_select %p131, %s14, 1
      %s133 = scalar_lea.vmem %s1, %s132
      %p134 = pneg %p87
      %p135 = pneg %p84
      %p136 = scmp.lt.s32.totalorder %s14, 1
      %s137 = scalar_select %p136, %s14, 1
      %s138 = smul.addr %s137, 2
      %s139 = smul.addr %s138, 8
      %s140 = scalar_lea.vmem %s2, %s139
      %s141 = smul.u32 32, %s14
      %p142 = scmp.lt.s32.totalorder %s141, 63
      %s143 = scalar_select %p142, %s141, 63
      %s144 = smul.addr %s143, 4
      %s145 = scalar_lea.vmem %s0, %s144
      %s146 = smul.u32 32, %s14
      %p147 = scmp.lt.s32.totalorder %s14, 1
      %s148 = scalar_select %p147, %s14, 1
      %s149 = scalar_lea.vmem %s1, %s148
      %p150 = scmp.lt.s32.totalorder %s14, 1
      %s151 = scalar_select %p150, %s14, 1
      %s152 = smul.addr %s151, 2
      %s153 = smul.addr %s152, 8
      %s154 = scalar_lea.vmem %s2, %s153
      %v155 = vld [vmem:[%s145] sm:$0xf]
      %v156 = vld [vmem:[%s145 + $0x4] sm:$0xf]
      %v157 = vld [vmem:[%s145 + $0x8] sm:$0xf]
      %v158 = vld [vmem:[%s145 + $0xc] sm:$0xf]
      %v159 = vld [vmem:[%s145 + $0x10] sm:$0xf]
      %v160 = vld [vmem:[%s145 + $0x14] sm:$0xf]
      %v161 = vld [vmem:[%s145 + $0x18] sm:$0xf]
      %v162 = vld [vmem:[%s145 + $0x1c] sm:$0xf]
      %v163 = vld [vmem:[%s145 + $0x20] sm:$0xf]
      %v164 = vld [vmem:[%s145 + $0x24] sm:$0xf]
      %v165 = vld [vmem:[%s145 + $0x28] sm:$0xf]
      %v166 = vld [vmem:[%s145 + $0x2c] sm:$0xf]
      %v167 = vld [vmem:[%s145 + $0x30] sm:$0xf]
      %v168 = vld [vmem:[%s145 + $0x34] sm:$0xf]
      %v169 = vld [vmem:[%s145 + $0x38] sm:$0xf]
      %v170 = vld [vmem:[%s145 + $0x3c] sm:$0xf]
      %v171 = vld [vmem:[%s145 + $0x40] sm:$0xf]
      %v172 = vld [vmem:[%s145 + $0x44] sm:$0xf]
      %v173 = vld [vmem:[%s145 + $0x48] sm:$0xf]
      %v174 = vld [vmem:[%s145 + $0x4c] sm:$0xf]
      %v175 = vld [vmem:[%s145 + $0x50] sm:$0xf]
      %v176 = vld [vmem:[%s145 + $0x54] sm:$0xf]
      %v177 = vld [vmem:[%s145 + $0x58] sm:$0xf]
      %v178 = vld [vmem:[%s145 + $0x5c] sm:$0xf]
      %v179 = vld [vmem:[%s145 + $0x60] sm:$0xf]
      %v180 = vld [vmem:[%s145 + $0x64] sm:$0xf]
      %v181 = vld [vmem:[%s145 + $0x68] sm:$0xf]
      %v182 = vld [vmem:[%s145 + $0x6c] sm:$0xf]
      %v183 = vld [vmem:[%s145 + $0x70] sm:$0xf]
      %v184 = vld [vmem:[%s145 + $0x74] sm:$0xf]
      %v185 = vld [vmem:[%s145 + $0x78] sm:$0xf]
      %v186 = vld [vmem:[%s145 + $0x7c] sm:$0xf]
      %v187 = vunpack.c.l.bf16 %v155
      %v188 = vunpack.c.l.bf16 %v156
      %v189 = vunpack.c.l.bf16 %v157
      %v190 = vunpack.c.l.bf16 %v158
      %v191 = vunpack.c.l.bf16 %v159
      %v192 = vunpack.c.l.bf16 %v160
      %v193 = vunpack.c.l.bf16 %v161
      %v194 = vunpack.c.l.bf16 %v162
      %v195 = vunpack.c.l.bf16 %v163
      %v196 = vunpack.c.l.bf16 %v164
      %v197 = vunpack.c.l.bf16 %v165
      %v198 = vunpack.c.l.bf16 %v166
      %v199 = vunpack.c.l.bf16 %v167
      %v200 = vunpack.c.l.bf16 %v168
      %v201 = vunpack.c.l.bf16 %v169
      %v202 = vunpack.c.l.bf16 %v170
      %v203 = vunpack.c.l.bf16 %v171
      %v204 = vunpack.c.l.bf16 %v172
      %v205 = vunpack.c.l.bf16 %v173
      %v206 = vunpack.c.l.bf16 %v174
      %v207 = vunpack.c.l.bf16 %v175
      %v208 = vunpack.c.l.bf16 %v176
      %v209 = vunpack.c.l.bf16 %v177
      %v210 = vunpack.c.l.bf16 %v178
      %v211 = vunpack.c.l.bf16 %v179
      %v212 = vunpack.c.l.bf16 %v180
      %v213 = vunpack.c.l.bf16 %v181
      %v214 = vunpack.c.l.bf16 %v182
      %v215 = vunpack.c.l.bf16 %v183
      %v216 = vunpack.c.l.bf16 %v184
      %v217 = vunpack.c.l.bf16 %v185
      %v218 = vunpack.c.l.bf16 %v186
      %vm219 = vcmask 130048
      %v220 = vsel %vm219, %v187, 0.0
      %v221 = vsel %vm219, %v188, 0.0
      %v222 = vadd.f32 %v220, %v221
      %v223 = vsel %vm219, %v189, 0.0
      %v224 = vadd.f32 %v222, %v223
      %v225 = vsel %vm219, %v190, 0.0
      %v226 = vadd.f32 %v224, %v225
      %v227 = vsel %vm219, %v191, 0.0
      %v228 = vadd.f32 %v226, %v227
      %v229 = vsel %vm219, %v192, 0.0
      %v230 = vadd.f32 %v228, %v229
      %v231 = vsel %vm219, %v193, 0.0
      %v232 = vadd.f32 %v230, %v231
      %v233 = vsel %vm219, %v194, 0.0
      %v234 = vadd.f32 %v232, %v233
      %v235 = vsel %vm219, %v195, 0.0
      %v236 = vadd.f32 %v234, %v235
      %v237 = vsel %vm219, %v196, 0.0
      %v238 = vadd.f32 %v236, %v237
      %v239 = vsel %vm219, %v197, 0.0
      %v240 = vadd.f32 %v238, %v239
      %v241 = vsel %vm219, %v198, 0.0
      %v242 = vadd.f32 %v240, %v241
      %v243 = vsel %vm219, %v199, 0.0
      %v244 = vadd.f32 %v242, %v243
      %v245 = vsel %vm219, %v200, 0.0
      %v246 = vadd.f32 %v244, %v245
      %v247 = vsel %vm219, %v201, 0.0
      %v248 = vadd.f32 %v246, %v247
      %v249 = vsel %vm219, %v202, 0.0
      %v250 = vadd.f32 %v248, %v249
      %v251 = vsel %vm219, %v203, 0.0
      %v252 = vadd.f32 %v250, %v251
      %v253 = vsel %vm219, %v204, 0.0
      %v254 = vadd.f32 %v252, %v253
      %v255 = vsel %vm219, %v205, 0.0
      %v256 = vadd.f32 %v254, %v255
      %v257 = vsel %vm219, %v206, 0.0
      %v258 = vadd.f32 %v256, %v257
      %v259 = vsel %vm219, %v207, 0.0
      %v260 = vadd.f32 %v258, %v259
      %v261 = vsel %vm219, %v208, 0.0
      %v262 = vadd.f32 %v260, %v261
      %v263 = vsel %vm219, %v209, 0.0
      %v264 = vadd.f32 %v262, %v263
      %v265 = vsel %vm219, %v210, 0.0
      %v266 = vadd.f32 %v264, %v265
      %v267 = vsel %vm219, %v211, 0.0
      %v268 = vadd.f32 %v266, %v267
      %v269 = vsel %vm219, %v212, 0.0
      %v270 = vadd.f32 %v268, %v269
      %v271 = vsel %vm219, %v213, 0.0
      %v272 = vadd.f32 %v270, %v271
      %v273 = vsel %vm219, %v214, 0.0
      %v274 = vadd.f32 %v272, %v273
      %v275 = vsel %vm219, %v215, 0.0
      %v276 = vadd.f32 %v274, %v275
      %v277 = vsel %vm219, %v216, 0.0
      %v278 = vadd.f32 %v276, %v277
      %v279 = vsel %vm219, %v217, 0.0
      %v280 = vadd.f32 %v278, %v279
      %v281 = vsel %vm219, %v218, 0.0
      %v282 = vadd.f32 %v280, %v281
      %v283 = vrot.slane %v282, 4
      %v284 = vadd.f32 %v282, %v283
      %v285 = vrot.slane %v284, 2
      %v286 = vadd.f32 %v284, %v285
      %v287 = vrot.slane %v286, 1
      %v288 = vadd.f32 %v286, %v287
      %vm289 = vcmask 122880
      %290 = vst.msk [vmem:[%s149] sm:$0x1] %vm289, %v288
      %v323 = vunpack.c.l.b16 %v155
      %v324 = vunpack.c.l.b16 %v156
      %v325 = vunpack.c.l.b16 %v157
      %v326 = vunpack.c.l.b16 %v158
      %v327 = vunpack.c.l.b16 %v159
      %v328 = vunpack.c.l.b16 %v160
      %v329 = vunpack.c.l.b16 %v161
      %v330 = vunpack.c.l.b16 %v162
      %v331 = vunpack.c.l.b16 %v163
      %v332 = vunpack.c.l.b16 %v164
      %v333 = vunpack.c.l.b16 %v165
      %v334 = vunpack.c.l.b16 %v166
      %v335 = vunpack.c.l.b16 %v167
      %v336 = vunpack.c.l.b16 %v168
      %v337 = vunpack.c.l.b16 %v169
      %v338 = vunpack.c.l.b16 %v170
      %v339 = vunpack.c.l.b16 %v171
      %v340 = vunpack.c.l.b16 %v172
      %v341 = vunpack.c.l.b16 %v173
      %v342 = vunpack.c.l.b16 %v174
      %v343 = vunpack.c.l.b16 %v175
      %v344 = vunpack.c.l.b16 %v176
      %v345 = vunpack.c.l.b16 %v177
      %v346 = vunpack.c.l.b16 %v178
      %v347 = vunpack.c.l.b16 %v179
      %v348 = vunpack.c.l.b16 %v180
      %v349 = vunpack.c.l.b16 %v181
      %v350 = vunpack.c.l.b16 %v182
      %v351 = vunpack.c.l.b16 %v183
      %v352 = vunpack.c.l.b16 %v184
      %v353 = vunpack.c.l.b16 %v185
      %v354 = vunpack.c.l.b16 %v186
      %v355 = vpack.c.b16 %v324, %v323
      %v356 = vpack.c.b16 %v326, %v325
      %v357 = vpack.c.b16 %v328, %v327
      %v358 = vpack.c.b16 %v330, %v329
      %v359 = vpack.c.b16 %v332, %v331
      %v360 = vpack.c.b16 %v334, %v333
      %v361 = vpack.c.b16 %v336, %v335
      %v362 = vpack.c.b16 %v338, %v337
      %v363 = vpack.c.b16 %v340, %v339
      %v364 = vpack.c.b16 %v342, %v341
      %v365 = vpack.c.b16 %v344, %v343
      %v366 = vpack.c.b16 %v346, %v345
      %v367 = vpack.c.b16 %v348, %v347
      %v368 = vpack.c.b16 %v350, %v349
      %v369 = vpack.c.b16 %v352, %v351
      %v370 = vpack.c.b16 %v354, %v353
      %387 = vxpose.xlu0.c.b16.start [1/8] %v355, 128
      %388 = vxpose.xlu0.c.b16.cont [2/8] %v356, 128
      %389 = vxpose.xlu0.c.b16.cont [3/8] %v357, 128
      %390 = vxpose.xlu0.c.b16.cont [4/8] %v358, 128
      %391 = vxpose.xlu0.c.b16.cont [5/8] %v359, 128
      %392 = vxpose.xlu0.c.b16.cont [6/8] %v360, 128
      %393 = vxpose.xlu0.c.b16.cont [7/8] %v361, 128
      %394 = vxpose.xlu0.c.b16.end [8/8] %v362, 128
      %v395 = vpop.trf.xlu0
      %v396 = vpop.trf.xlu0
      %v397 = vpop.trf.xlu0
      %v398 = vpop.trf.xlu0
      %v399 = vpop.trf.xlu0
      %v400 = vpop.trf.xlu0
      %v401 = vpop.trf.xlu0
      %v402 = vpop.trf.xlu0
      %403 = vxpose.xlu0.c.b16.start [1/8] %v363, 128
      %404 = vxpose.xlu0.c.b16.cont [2/8] %v364, 128
      %405 = vxpose.xlu0.c.b16.cont [3/8] %v365, 128
      %406 = vxpose.xlu0.c.b16.cont [4/8] %v366, 128
      %407 = vxpose.xlu0.c.b16.cont [5/8] %v367, 128
      %408 = vxpose.xlu0.c.b16.cont [6/8] %v368, 128
      %409 = vxpose.xlu0.c.b16.cont [7/8] %v369, 128
      %410 = vxpose.xlu0.c.b16.end [8/8] %v370, 128
      %v411 = vpop.trf.xlu0
      %v412 = vpop.trf.xlu0
      %v413 = vpop.trf.xlu0
      %v414 = vpop.trf.xlu0
      %v415 = vpop.trf.xlu0
      %v416 = vpop.trf.xlu0
      %v417 = vpop.trf.xlu0
      %v418 = vpop.trf.xlu0
      %419 = vmatpush.bf16.msra.mxu0 %v362
      %420 = vmatpush.bf16.msra.mxu0 %v361
      %421 = vmatpush.bf16.msra.mxu0 %v360
      %422 = vmatpush.bf16.msra.mxu0 %v359
      %423 = vmatpush.bf16.msra.mxu0 %v358
      %424 = vmatpush.bf16.msra.mxu0 %v357
      %425 = vmatpush.bf16.msra.mxu0 %v356
      %426 = vmatpush.bf16.msra.mxu0 %v355
      %427 = vmatmul.bf16.gmra.mxu0 %v395
      %v428 = vpop.f32.mrf.mxu0
      %v429 = vadd.f32 0.0, %v428
      %v430 = vpop.f32.mrf.mxu0
      %v431 = vadd.f32 0.0, %v430
      %432 = vdwg.mxu0
      %433 = vmatpush.bf16.msra.mxu0 %v370
      %434 = vmatpush.bf16.msra.mxu0 %v369
      %435 = vmatpush.bf16.msra.mxu0 %v368
      %436 = vmatpush.bf16.msra.mxu0 %v367
      %437 = vmatpush.bf16.msra.mxu0 %v366
      %438 = vmatpush.bf16.msra.mxu0 %v365
      %439 = vmatpush.bf16.msra.mxu0 %v364
      %440 = vmatpush.bf16.msra.mxu0 %v363
      %441 = vmatmul.bf16.gmra.mxu0 %v411
      %v442 = vpop.f32.mrf.mxu0
      %v443 = vadd.f32 %v429, %v442
      %v444 = vpop.f32.mrf.mxu0
      %v445 = vadd.f32 %v431, %v444
      %446 = vdwg.mxu0
      %447 = vst.msk [vmem:[%s154] sm:$0xff] %vm219, %v443
      %448 = vst.msk [vmem:[%s154 + $0x8] sm:$0xff] %vm219, %v445
      %p449 = scmp.lt.s32.totalorder %s14, 1
      %s450 = scalar_select %p449, %s14, 1
      %s451 = scalar_lea.vmem %s1, %s450
      %p452 = scmp.lt.s32.totalorder %s14, 1
      %s453 = scalar_select %p452, %s14, 1
      %s454 = smul.addr %s453, 2
      %s455 = smul.addr %s454, 8
      %s456 = scalar_lea.vmem %s2, %s455
      // Predicated region
      $region25: #{decoder_block_forward.2} parent=23 // pred_check
        %p457 = pneg %p58
      $region26: #{decoder_block_forward.2} parent=23 // pred_check_branch
        %459 = sbr.rel (%p457) target = $region28
      $region27: #{decoder_block_forward.2} parent=23 // pred_region
        _
      $region28: #{decoder_block_forward.2} parent=23 // pred_fallthru
        _
      // Predicated region
      $region29: #{decoder_block_forward.2} parent=23 // pred_check
        %p460 = pneg %p84
      $region30: #{decoder_block_forward.2} parent=23 // pred_check_branch
        %462 = sbr.rel (%p460) target = $region32
      $region31: #{decoder_block_forward.2} parent=23 // pred_region
        _
      $region32: #{decoder_block_forward.2} parent=23 // pred_fallthru
        _
    $region24: #{decoder_block_forward.2} parent=5 // pred_fallthru
      _
    %p463 = scmp.le.s32.totalorder 2, %s9
    // Predicated region
    $region33: #{decoder_block_forward.2} parent=5 // pred_check
      %p464 = pneg %p463
    $region34: #{decoder_block_forward.2} parent=5 // pred_check_branch
      %466 = sbr.rel (%p464) target = $region36
    $region35: #{decoder_block_forward.2} parent=5 // pred_region
      %s467 = ssub.s32 %s9, 2
      // Predicated region
      $region37: #{decoder_block_forward.2} parent=35 // pred_check
        %p468 = pneg %p64
      $region38: #{decoder_block_forward.2} parent=35 // pred_check_branch
        %470 = sbr.rel (%p468) target = $region40
      $region39: #{decoder_block_forward.2} parent=35 // pred_region
        %p471 = scmp.lt.s32.totalorder %s15, 1
        %s472 = scalar_select %p471, %s15, 1
        %s473 = scalar_lea.vmem %s1, %s472
      $region40: #{decoder_block_forward.2} parent=35 // pred_fallthru
        _
      // Predicated region
      $region41: #{decoder_block_forward.2} parent=35 // pred_check
        %p474 = pneg %p90
      $region42: #{decoder_block_forward.2} parent=35 // pred_check_branch
        %476 = sbr.rel (%p474) target = $region44
      $region43: #{decoder_block_forward.2} parent=35 // pred_region
        %p477 = scmp.lt.s32.totalorder %s15, 1
        %s478 = scalar_select %p477, %s15, 1
        %s479 = smul.addr %s478, 2
        %s480 = smul.addr %s479, 8
        %s481 = scalar_lea.vmem %s2, %s480
      $region44: #{decoder_block_forward.2} parent=35 // pred_fallthru
        _
    $region36: #{decoder_block_forward.2} parent=5 // pred_fallthru
      _
  $region6: #{decoder_block_forward.2} parent=0 // loop_footer
    %s13 = sadd.s32 1, %s9
  $region7: #{decoder_block_forward.2} parent=0 // loop_footer_branch
    %8 = sbr.rel target = $region3
  $region8: #{decoder_block_forward.2} parent=0 // loop_exit
    _

// kernel: decoder_block_forward.3
$region0: #{decoder_block_forward.3}
  #allocation0 [shape = 'u32[]', space=smem, size = 0x4, offset = 0x4, fixed_abs, tag = 'smem constant byte address 0x4 - core index']
  #allocation1 [shape = 'u32[72,128]{1,0:T(1,128)}', space=vmem, size = 0x9000, scoped, tag = 'internal scratch']
  %s0 = inlined_call_operand.vmem [shape: bf16[512,16], index: 0, kind: input, shape index: {}]
  %s1 = inlined_call_operand.vmem [shape: bf16[16,128], index: 1, kind: input, shape index: {}]
  %s2 = inlined_call_operand.vmem [shape: f32[1,128], index: 2, kind: input, shape index: {}]
  %s3 = inlined_call_operand.vmem [shape: f32[1,128], index: 3, kind: input, shape index: {}]
  %s4 = inlined_call_operand.vmem [shape: bf16[512,128], index: 4, kind: output, shape index: {}]
  %s5 = sld [smem:[#allocation0]]
  $region49: #{decoder_block_forward.3} parent=0
    _
  %s7 = ssub.s32 1, %s5
  %s8 = scalar_select 0, %s7, %s5
  loop: start=0, step=1, limit=4
  $region2: #{decoder_block_forward.3} parent=0 // loop_pre_header
    _
  $region3: #{decoder_block_forward.3} parent=0 // loop_header
    %s10 = sphi 0, %s14
    %p11 = scmp.ge.s32.totalorder %s10, 4
    %s20 = sphi 0, %s22
    %s23 = sphi 0, %s20
    %s24 = sphi 0, %s23
    %s40 = sphi 0, %s24
    %s44 = sphi 0, %s44
    %s46 = sphi 0, %s44
    %s47 = sphi 0, %s46
    %s61 = sphi 0, %s47
    %s65 = sphi 0, %s65
    %s67 = sphi 0, %s65
    %s68 = sphi 0, %s67
    %s82 = sphi 0, %s68
    %s86 = sphi 0, %s86
    %s88 = sphi 0, %s86
    %s89 = sphi 0, %s88
    %s103 = sphi 0, %s89
    %s109 = sphi 0, %s111
    %s112 = sphi 0, %s109
    %s113 = sphi 0, %s112
    %s129 = sphi 0, %s113
  $region4: #{decoder_block_forward.3} parent=0 // loop_header_branch
    %13 = sbr.rel (%p11) target = $region8
  $region5: #{decoder_block_forward.3} parent=0 // loop_body
    %s15 = ssub.s32 %s10, 1
    %s16 = ssub.s32 %s10, 2
    %s17 = sadd.s32 %s10, 1
    %s18 = ssub.s32 %s10, %s17
    %p19 = scmp.eq.s32.totalorder %s18, 0
    %s21 = sadd.s32 %s20, 1
    %s22 = scalar_select %p19, %s20, %s21
    %p25 = pneg %p19
    %p26 = scmp.eq.s32.totalorder %s10, 1
    %p27 = por %p25, %p26
    %p28 = scmp.ne.s32.totalorder %s20, %s23
    %p29 = scmp.eq.s32.totalorder %s10, 0
    %p30 = por %p28, %p29
    %p31 = scmp.ne.s32.totalorder %s20, %s23
    %p32 = scmp.eq.s32.totalorder %s15, 1
    %p33 = por %p31, %p32
    %p34 = scmp.ne.s32.totalorder %s23, %s24
    %p35 = scmp.eq.s32.totalorder %s15, 0
    %p36 = por %p34, %p35
    %p37 = scmp.ne.s32.totalorder %s23, %s24
    %p38 = scmp.eq.s32.totalorder %s16, 1
    %p39 = por %p37, %p38
    %p41 = scmp.ne.s32.totalorder %s24, %s40
    %p42 = scmp.eq.s32.totalorder %s16, 0
    %p43 = por %p41, %p42
    %s45 = sadd.s32 %s44, 1
    %p48 = scmp.eq.s32.totalorder %s10, 1
    %p49 = scmp.ne.s32.totalorder %s44, %s46
    %p50 = scmp.eq.s32.totalorder %s10, 0
    %p51 = por %p49, %p50
    %p52 = scmp.ne.s32.totalorder %s44, %s46
    %p53 = scmp.eq.s32.totalorder %s15, 1
    %p54 = por %p52, %p53
    %p55 = scmp.ne.s32.totalorder %s46, %s47
    %p56 = scmp.eq.s32.totalorder %s15, 0
    %p57 = por %p55, %p56
    %p58 = scmp.ne.s32.totalorder %s46, %s47
    %p59 = scmp.eq.s32.totalorder %s16, 1
    %p60 = por %p58, %p59
    %p62 = scmp.ne.s32.totalorder %s47, %s61
    %p63 = scmp.eq.s32.totalorder %s16, 0
    %p64 = por %p62, %p63
    %s66 = sadd.s32 %s65, 1
    %p69 = scmp.eq.s32.totalorder %s10, 1
    %p70 = scmp.ne.s32.totalorder %s65, %s67
    %p71 = scmp.eq.s32.totalorder %s10, 0
    %p72 = por %p70, %p71
    %p73 = scmp.ne.s32.totalorder %s65, %s67
    %p74 = scmp.eq.s32.totalorder %s15, 1
    %p75 = por %p73, %p74
    %p76 = scmp.ne.s32.totalorder %s67, %s68
    %p77 = scmp.eq.s32.totalorder %s15, 0
    %p78 = por %p76, %p77
    %p79 = scmp.ne.s32.totalorder %s67, %s68
    %p80 = scmp.eq.s32.totalorder %s16, 1
    %p81 = por %p79, %p80
    %p83 = scmp.ne.s32.totalorder %s68, %s82
    %p84 = scmp.eq.s32.totalorder %s16, 0
    %p85 = por %p83, %p84
    %s87 = sadd.s32 %s86, 1
    %p90 = scmp.eq.s32.totalorder %s10, 1
    %p91 = scmp.ne.s32.totalorder %s86, %s88
    %p92 = scmp.eq.s32.totalorder %s10, 0
    %p93 = por %p91, %p92
    %p94 = scmp.ne.s32.totalorder %s86, %s88
    %p95 = scmp.eq.s32.totalorder %s15, 1
    %p96 = por %p94, %p95
    %p97 = scmp.ne.s32.totalorder %s88, %s89
    %p98 = scmp.eq.s32.totalorder %s15, 0
    %p99 = por %p97, %p98
    %p100 = scmp.ne.s32.totalorder %s88, %s89
    %p101 = scmp.eq.s32.totalorder %s16, 1
    %p102 = por %p100, %p101
    %p104 = scmp.ne.s32.totalorder %s89, %s103
    %p105 = scmp.eq.s32.totalorder %s16, 0
    %p106 = por %p104, %p105
    %s107 = ssub.s32 %s10, %s17
    %p108 = scmp.eq.s32.totalorder %s107, 0
    %s110 = sadd.s32 %s109, 1
    %s111 = scalar_select %p108, %s109, %s110
    %p114 = pneg %p108
    %p115 = scmp.eq.s32.totalorder %s10, 1
    %p116 = por %p114, %p115
    %p117 = scmp.ne.s32.totalorder %s109, %s112
    %p118 = scmp.eq.s32.totalorder %s10, 0
    %p119 = por %p117, %p118
    %p120 = scmp.ne.s32.totalorder %s109, %s112
    %p121 = scmp.eq.s32.totalorder %s15, 1
    %p122 = por %p120, %p121
    %p123 = scmp.ne.s32.totalorder %s112, %s113
    %p124 = scmp.eq.s32.totalorder %s15, 0
    %p125 = por %p123, %p124
    %p126 = scmp.ne.s32.totalorder %s112, %s113
    %p127 = scmp.eq.s32.totalorder %s16, 1
    %p128 = por %p126, %p127
    %p130 = scmp.ne.s32.totalorder %s113, %s129
    %p131 = scmp.eq.s32.totalorder %s16, 0
    %p132 = por %p130, %p131
    %p133 = scmp.le.s32.totalorder 1, %s10
    %p134 = scmp.lt.s32.totalorder %s10, 3
    %p135 = pnand %p133, %p134
    %p136 = pneg %p135
    // Predicated region
    $region9: #{decoder_block_forward.3} parent=5 // pred_check
      _
    $region10: #{decoder_block_forward.3} parent=5 // pred_check_branch
      %138 = sbr.rel (%p135) target = $region12
    $region11: #{decoder_block_forward.3} parent=5 // pred_region
      %s139 = ssub.s32 %s10, 1
      // Predicated region
      $region13: #{decoder_block_forward.3} parent=11 // pred_check
        %p140 = pneg %p57
      $region14: #{decoder_block_forward.3} parent=11 // pred_check_branch
        %142 = sbr.rel (%p140) target = $region16
      $region15: #{decoder_block_forward.3} parent=11 // pred_region
        _
      $region16: #{decoder_block_forward.3} parent=11 // pred_fallthru
        _
      // Predicated region
      $region17: #{decoder_block_forward.3} parent=11 // pred_check
        %p143 = pneg %p78
      $region18: #{decoder_block_forward.3} parent=11 // pred_check_branch
        %145 = sbr.rel (%p143) target = $region20
      $region19: #{decoder_block_forward.3} parent=11 // pred_region
        _
      $region20: #{decoder_block_forward.3} parent=11 // pred_fallthru
        _
      // Predicated region
      $region21: #{decoder_block_forward.3} parent=11 // pred_check
        %p146 = pneg %p99
      $region22: #{decoder_block_forward.3} parent=11 // pred_check_branch
        %148 = sbr.rel (%p146) target = $region24
      $region23: #{decoder_block_forward.3} parent=11 // pred_region
        _
      $region24: #{decoder_block_forward.3} parent=11 // pred_fallthru
        _
    $region12: #{decoder_block_forward.3} parent=5 // pred_fallthru
      _
    %p149 = scmp.lt.s32.totalorder %s10, 2
    // Predicated region
    $region25: #{decoder_block_forward.3} parent=5 // pred_check
      %p150 = pneg %p149
    $region26: #{decoder_block_forward.3} parent=5 // pred_check_branch
      %152 = sbr.rel (%p150) target = $region28
    $region27: #{decoder_block_forward.3} parent=5 // pred_region
      // Predicated region
      $region29: #{decoder_block_forward.3} parent=27 // pred_check
        %p153 = pneg %p30
      $region30: #{decoder_block_forward.3} parent=27 // pred_check_branch
        %155 = sbr.rel (%p153) target = $region32
      $region31: #{decoder_block_forward.3} parent=27 // pred_region
        %s156 = smul.u32 32, %s10
        %p157 = scmp.lt.s32.totalorder %s156, 63
        %s158 = scalar_select %p157, %s156, 63
        %s159 = smul.addr %s158, 4
        %s160 = scalar_lea.vmem %s0, %s159
        %s161 = smul.u32 32, %s10
      $region32: #{decoder_block_forward.3} parent=27 // pred_fallthru
        _
    $region28: #{decoder_block_forward.3} parent=5 // pred_fallthru
      _
    %p162 = scmp.le.s32.totalorder 1, %s10
    %p163 = scmp.lt.s32.totalorder %s10, 3
    %p164 = pnand %p162, %p163
    %p165 = pneg %p164
    // Predicated region
    $region33: #{decoder_block_forward.3} parent=5 // pred_check
      _
    $region34: #{decoder_block_forward.3} parent=5 // pred_check_branch
      %167 = sbr.rel (%p164) target = $region36
    $region35: #{decoder_block_forward.3} parent=5 // pred_region
      %s168 = ssub.s32 %s10, 1
      %s169 = smul.u32 32, %s15
      %p170 = scmp.lt.s32.totalorder %s169, 63
      %s171 = scalar_select %p170, %s169, 63
      %s172 = smul.addr %s171, 4
      %s173 = scalar_lea.vmem %s0, %s172
      %p174 = pneg %p36
      %p175 = pneg %p33
      %p176 = pneg %p57
      %p177 = pneg %p54
      %p178 = pneg %p78
      %p179 = pneg %p75
      %p180 = pneg %p99
      %p181 = pneg %p96
      %p182 = pneg %p125
      %p183 = pneg %p122
      %s184 = smul.u32 32, %s15
      %p185 = scmp.lt.s32.totalorder %s184, 63
      %s186 = scalar_select %p185, %s184, 63
      %s187 = smul.addr %s186, 4
      %s188 = scalar_lea.vmem %s4, %s187
      %s189 = smul.u32 32, %s15
      %p190 = scmp.lt.s32.totalorder %s189, 63
      %s191 = scalar_select %p190, %s189, 63
      %s192 = smul.addr %s191, 4
      %s193 = scalar_lea.vmem %s0, %s192
      %s194 = smul.u32 32, %s15
      %s195 = smul.u32 32, %s15
      %p196 = scmp.lt.s32.totalorder %s195, 63
      %s197 = scalar_select %p196, %s195, 63
      %s198 = smul.addr %s197, 4
      %s199 = scalar_lea.vmem %s4, %s198
      %s200 = smul.u32 32, %s15
      %v202 = vld [vmem:[%s193] sm:$0xf]
      %v203 = vld [vmem:[%s193 + $0x4] sm:$0xf]
      %v204 = vld [vmem:[%s193 + $0x8] sm:$0xf]
      %v205 = vld [vmem:[%s193 + $0xc] sm:$0xf]
      %v206 = vld [vmem:[%s193 + $0x10] sm:$0xf]
      %v207 = vld [vmem:[%s193 + $0x14] sm:$0xf]
      %v208 = vld [vmem:[%s193 + $0x18] sm:$0xf]
      %v209 = vld [vmem:[%s193 + $0x1c] sm:$0xf]
      %v210 = vld [vmem:[%s193 + $0x20] sm:$0xf]
      %v211 = vld [vmem:[%s193 + $0x24] sm:$0xf]
      %v212 = vld [vmem:[%s193 + $0x28] sm:$0xf]
      %v213 = vld [vmem:[%s193 + $0x2c] sm:$0xf]
      %v214 = vld [vmem:[%s193 + $0x30] sm:$0xf]
      %v215 = vld [vmem:[%s193 + $0x34] sm:$0xf]
      %v216 = vld [vmem:[%s193 + $0x38] sm:$0xf]
      %v217 = vld [vmem:[%s193 + $0x3c] sm:$0xf]
      %v218 = vld [vmem:[%s193 + $0x40] sm:$0xf]
      %v219 = vld [vmem:[%s193 + $0x44] sm:$0xf]
      %v220 = vld [vmem:[%s193 + $0x48] sm:$0xf]
      %v221 = vld [vmem:[%s193 + $0x4c] sm:$0xf]
      %v222 = vld [vmem:[%s193 + $0x50] sm:$0xf]
      %v223 = vld [vmem:[%s193 + $0x54] sm:$0xf]
      %v224 = vld [vmem:[%s193 + $0x58] sm:$0xf]
      %v225 = vld [vmem:[%s193 + $0x5c] sm:$0xf]
      %v226 = vld [vmem:[%s193 + $0x60] sm:$0xf]
      %v227 = vld [vmem:[%s193 + $0x64] sm:$0xf]
      %v228 = vld [vmem:[%s193 + $0x68] sm:$0xf]
      %v229 = vld [vmem:[%s193 + $0x6c] sm:$0xf]
      %v230 = vld [vmem:[%s193 + $0x70] sm:$0xf]
      %v231 = vld [vmem:[%s193 + $0x74] sm:$0xf]
      %v232 = vld [vmem:[%s193 + $0x78] sm:$0xf]
      %v233 = vld [vmem:[%s193 + $0x7c] sm:$0xf]
      %v234 = vld [vmem:[%s1] sm:$0xf]
      %v235 = vld [vmem:[%s1 + $0x4] sm:$0xf]
      %v268 = vunpack.c.l.b16 %v202
      %v269 = vunpack.c.l.b16 %v203
      %v270 = vunpack.c.l.b16 %v204
      %v271 = vunpack.c.l.b16 %v205
      %v272 = vunpack.c.l.b16 %v206
      %v273 = vunpack.c.l.b16 %v207
      %v274 = vunpack.c.l.b16 %v208
      %v275 = vunpack.c.l.b16 %v209
      %v276 = vunpack.c.l.b16 %v210
      %v277 = vunpack.c.l.b16 %v211
      %v278 = vunpack.c.l.b16 %v212
      %v279 = vunpack.c.l.b16 %v213
      %v280 = vunpack.c.l.b16 %v214
      %v281 = vunpack.c.l.b16 %v215
      %v282 = vunpack.c.l.b16 %v216
      %v283 = vunpack.c.l.b16 %v217
      %v284 = vunpack.c.l.b16 %v218
      %v285 = vunpack.c.l.b16 %v219
      %v286 = vunpack.c.l.b16 %v220
      %v287 = vunpack.c.l.b16 %v221
      %v288 = vunpack.c.l.b16 %v222
      %v289 = vunpack.c.l.b16 %v223
      %v290 = vunpack.c.l.b16 %v224
      %v291 = vunpack.c.l.b16 %v225
      %v292 = vunpack.c.l.b16 %v226
      %v293 = vunpack.c.l.b16 %v227
      %v294 = vunpack.c.l.b16 %v228
      %v295 = vunpack.c.l.b16 %v229
      %v296 = vunpack.c.l.b16 %v230
      %v297 = vunpack.c.l.b16 %v231
      %v298 = vunpack.c.l.b16 %v232
      %v299 = vunpack.c.l.b16 %v233
      %v300 = vpack.c.b16 %v269, %v268
      %v301 = vpack.c.b16 %v271, %v270
      %v302 = vpack.c.b16 %v273, %v272
      %v303 = vpack.c.b16 %v275, %v274
      %v304 = vpack.c.b16 %v277, %v276
      %v305 = vpack.c.b16 %v279, %v278
      %v306 = vpack.c.b16 %v281, %v280
      %v307 = vpack.c.b16 %v283, %v282
      %v308 = vpack.c.b16 %v285, %v284
      %v309 = vpack.c.b16 %v287, %v286
      %v310 = vpack.c.b16 %v289, %v288
      %v311 = vpack.c.b16 %v291, %v290
      %v312 = vpack.c.b16 %v293, %v292
      %v313 = vpack.c.b16 %v295, %v294
      %v314 = vpack.c.b16 %v297, %v296
      %v315 = vpack.c.b16 %v299, %v298
      %v318 = vunpack.c.l.b16 %v234
      %v319 = vunpack.c.l.b16 %v235
      %v320 = vpack.c.b16 %v319, %v318
      %vm322 = vcmask 130048
      %v324 = vsel %vm322, %v300, 0
      %v327 = vsel %vm322, %v301, 0
      %v330 = vsel %vm322, %v302, 0
      %v333 = vsel %vm322, %v303, 0
      %v336 = vsel %vm322, %v304, 0
      %v339 = vsel %vm322, %v305, 0
      %v342 = vsel %vm322, %v306, 0
      %v345 = vsel %vm322, %v307, 0
      %v348 = vsel %vm322, %v308, 0
      %v351 = vsel %vm322, %v309, 0
      %v354 = vsel %vm322, %v310, 0
      %v357 = vsel %vm322, %v311, 0
      %v360 = vsel %vm322, %v312, 0
      %v363 = vsel %vm322, %v313, 0
      %v366 = vsel %vm322, %v314, 0
      %v369 = vsel %vm322, %v315, 0
      %371 = vmatpush.bf16.msra.mxu0 0
      %372 = vmatpush.bf16.msra.mxu0 0
      %373 = vmatpush.bf16.msra.mxu0 0
      %374 = vmatpush.bf16.msra.mxu0 0
      %375 = vmatpush.bf16.msra.mxu0 0
      %376 = vmatpush.bf16.msra.mxu0 0
      %377 = vmatpush.bf16.msra.mxu0 0
      %378 = vmatpush.bf16.msra.mxu0 %v320
      %379 = vmatmul.bf16.gmra.mxu0 %v324
      %v380 = vpop.f32.mrf.mxu0
      %v381 = vadd.f32 0.0, %v380
      %v382 = vpop.f32.mrf.mxu0
      %v383 = vadd.f32 0.0, %v382
      %384 = vmatmul.bf16.gmra.mxu0 %v327
      %v385 = vpop.f32.mrf.mxu0
      %v386 = vadd.f32 0.0, %v385
      %v387 = vpop.f32.mrf.mxu0
      %v388 = vadd.f32 0.0, %v387
      %389 = vmatmul.bf16.gmra.mxu0 %v330
      %v390 = vpop.f32.mrf.mxu0
      %v391 = vadd.f32 0.0, %v390
      %v392 = vpop.f32.mrf.mxu0
      %v393 = vadd.f32 0.0, %v392
      %394 = vmatmul.bf16.gmra.mxu0 %v333
      %v395 = vpop.f32.mrf.mxu0
      %v396 = vadd.f32 0.0, %v395
      %v397 = vpop.f32.mrf.mxu0
      %v398 = vadd.f32 0.0, %v397
      %399 = vmatmul.bf16.gmra.mxu0 %v336
      %v400 = vpop.f32.mrf.mxu0
      %v401 = vadd.f32 0.0, %v400
      %v402 = vpop.f32.mrf.mxu0
      %v403 = vadd.f32 0.0, %v402
      %404 = vmatmul.bf16.gmra.mxu0 %v339
      %v405 = vpop.f32.mrf.mxu0
      %v406 = vadd.f32 0.0, %v405
      %v407 = vpop.f32.mrf.mxu0
      %v408 = vadd.f32 0.0, %v407
      %409 = vmatmul.bf16.gmra.mxu0 %v342
      %v410 = vpop.f32.mrf.mxu0
      %v411 = vadd.f32 0.0, %v410
      %v412 = vpop.f32.mrf.mxu0
      %v413 = vadd.f32 0.0, %v412
      %414 = vmatmul.bf16.gmra.mxu0 %v345
      %v415 = vpop.f32.mrf.mxu0
      %v416 = vadd.f32 0.0, %v415
      %v417 = vpop.f32.mrf.mxu0
      %v418 = vadd.f32 0.0, %v417
      %419 = vmatmul.bf16.gmra.mxu0 %v348
      %v420 = vpop.f32.mrf.mxu0
      %v421 = vadd.f32 0.0, %v420
      %v422 = vpop.f32.mrf.mxu0
      %v423 = vadd.f32 0.0, %v422
      %424 = vmatmul.bf16.gmra.mxu0 %v351
      %v425 = vpop.f32.mrf.mxu0
      %v426 = vadd.f32 0.0, %v425
      %v427 = vpop.f32.mrf.mxu0
      %v428 = vadd.f32 0.0, %v427
      %429 = vmatmul.bf16.gmra.mxu0 %v354
      %v430 = vpop.f32.mrf.mxu0
      %v431 = vadd.f32 0.0, %v430
      %v432 = vpop.f32.mrf.mxu0
      %v433 = vadd.f32 0.0, %v432
      %434 = vmatmul.bf16.gmra.mxu0 %v357
      %v435 = vpop.f32.mrf.mxu0
      %v436 = vadd.f32 0.0, %v435
      %v437 = vpop.f32.mrf.mxu0
      %v438 = vadd.f32 0.0, %v437
      %439 = vmatmul.bf16.gmra.mxu0 %v360
      %v440 = vpop.f32.mrf.mxu0
      %v441 = vadd.f32 0.0, %v440
      %v442 = vpop.f32.mrf.mxu0
      %v443 = vadd.f32 0.0, %v442
      %444 = vmatmul.bf16.gmra.mxu0 %v363
      %v445 = vpop.f32.mrf.mxu0
      %v446 = vadd.f32 0.0, %v445
      %v447 = vpop.f32.mrf.mxu0
      %v448 = vadd.f32 0.0, %v447
      %449 = vmatmul.bf16.gmra.mxu0 %v366
      %v450 = vpop.f32.mrf.mxu0
      %v451 = vadd.f32 0.0, %v450
      %v452 = vpop.f32.mrf.mxu0
      %v453 = vadd.f32 0.0, %v452
      %454 = vmatmul.bf16.gmra.mxu0 %v369
      %v455 = vpop.f32.mrf.mxu0
      %v456 = vadd.f32 0.0, %v455
      %v457 = vpop.f32.mrf.mxu0
      %v458 = vadd.f32 0.0, %v457
      %459 = vdwg.mxu0
      %v460 = vld [vmem:[%s2] sm:$0x1]
      %v462 = vperm.slane %v460, 0
      %v464 = vmul.f32 %v381, %v462
      %v465 = vmul.f32 %v383, %v462
      %v466 = vmul.f32 %v386, %v462
      %v467 = vmul.f32 %v388, %v462
      %v468 = vmul.f32 %v391, %v462
      %v469 = vmul.f32 %v393, %v462
      %v470 = vmul.f32 %v396, %v462
      %v471 = vmul.f32 %v398, %v462
      %v472 = vmul.f32 %v401, %v462
      %v473 = vmul.f32 %v403, %v462
      %v474 = vmul.f32 %v406, %v462
      %v475 = vmul.f32 %v408, %v462
      %v476 = vmul.f32 %v411, %v462
      %v477 = vmul.f32 %v413, %v462
      %v478 = vmul.f32 %v416, %v462
      %v479 = vmul.f32 %v418, %v462
      %v480 = vmul.f32 %v421, %v462
      %v481 = vmul.f32 %v423, %v462
      %v482 = vmul.f32 %v426, %v462
      %v483 = vmul.f32 %v428, %v462
      %v484 = vmul.f32 %v431, %v462
      %v485 = vmul.f32 %v433, %v462
      %v486 = vmul.f32 %v436, %v462
      %v487 = vmul.f32 %v438, %v462
      %v488 = vmul.f32 %v441, %v462
      %v489 = vmul.f32 %v443, %v462
      %v490 = vmul.f32 %v446, %v462
      %v491 = vmul.f32 %v448, %v462
      %v492 = vmul.f32 %v451, %v462
      %v493 = vmul.f32 %v453, %v462
      %v494 = vmul.f32 %v456, %v462
      %v495 = vmul.f32 %v458, %v462
      %v496 = vld [vmem:[%s3] sm:$0x1]
      %v498 = vperm.slane %v496, 0
      %v500 = vadd.f32 %v464, %v498
      %v501 = vadd.f32 %v465, %v498
      %v502 = vadd.f32 %v466, %v498
      %v503 = vadd.f32 %v467, %v498
      %v504 = vadd.f32 %v468, %v498
      %v505 = vadd.f32 %v469, %v498
      %v506 = vadd.f32 %v470, %v498
      %v507 = vadd.f32 %v471, %v498
      %v508 = vadd.f32 %v472, %v498
      %v509 = vadd.f32 %v473, %v498
      %v510 = vadd.f32 %v474, %v498
      %v511 = vadd.f32 %v475, %v498
      %v512 = vadd.f32 %v476, %v498
      %v513 = vadd.f32 %v477, %v498
      %v514 = vadd.f32 %v478, %v498
      %v515 = vadd.f32 %v479, %v498
      %v516 = vadd.f32 %v480, %v498
      %v517 = vadd.f32 %v481, %v498
      %v518 = vadd.f32 %v482, %v498
      %v519 = vadd.f32 %v483, %v498
      %v520 = vadd.f32 %v484, %v498
      %v521 = vadd.f32 %v485, %v498
      %v522 = vadd.f32 %v486, %v498
      %v523 = vadd.f32 %v487, %v498
      %v524 = vadd.f32 %v488, %v498
      %v525 = vadd.f32 %v489, %v498
      %v526 = vadd.f32 %v490, %v498
      %v527 = vadd.f32 %v491, %v498
      %v528 = vadd.f32 %v492, %v498
      %v529 = vadd.f32 %v493, %v498
      %v530 = vadd.f32 %v494, %v498
      %v531 = vadd.f32 %v495, %v498
      %v532 = vmax.f32 %v500, 0.0
      %v533 = vmax.f32 %v501, 0.0
      %v534 = vmax.f32 %v502, 0.0
      %v535 = vmax.f32 %v503, 0.0
      %v536 = vmax.f32 %v504, 0.0
      %v537 = vmax.f32 %v505, 0.0
      %v538 = vmax.f32 %v506, 0.0
      %v539 = vmax.f32 %v507, 0.0
      %v540 = vmax.f32 %v508, 0.0
      %v541 = vmax.f32 %v509, 0.0
      %v542 = vmax.f32 %v510, 0.0
      %v543 = vmax.f32 %v511, 0.0
      %v544 = vmax.f32 %v512, 0.0
      %v545 = vmax.f32 %v513, 0.0
      %v546 = vmax.f32 %v514, 0.0
      %v547 = vmax.f32 %v515, 0.0
      %v548 = vmax.f32 %v516, 0.0
      %v549 = vmax.f32 %v517, 0.0
      %v550 = vmax.f32 %v518, 0.0
      %v551 = vmax.f32 %v519, 0.0
      %v552 = vmax.f32 %v520, 0.0
      %v553 = vmax.f32 %v521, 0.0
      %v554 = vmax.f32 %v522, 0.0
      %v555 = vmax.f32 %v523, 0.0
      %v556 = vmax.f32 %v524, 0.0
      %v557 = vmax.f32 %v525, 0.0
      %v558 = vmax.f32 %v526, 0.0
      %v559 = vmax.f32 %v527, 0.0
      %v560 = vmax.f32 %v528, 0.0
      %v561 = vmax.f32 %v529, 0.0
      %v562 = vmax.f32 %v530, 0.0
      %v563 = vmax.f32 %v531, 0.0
      %v564 = vpack.c.bf16 %v532, %v532
      %v565 = vpack.c.bf16 %v533, %v533
      %v566 = vpack.c.bf16 %v534, %v534
      %v567 = vpack.c.bf16 %v535, %v535
      %v568 = vpack.c.bf16 %v536, %v536
      %v569 = vpack.c.bf16 %v537, %v537
      %v570 = vpack.c.bf16 %v538, %v538
      %v571 = vpack.c.bf16 %v539, %v539
      %v572 = vpack.c.bf16 %v540, %v540
      %v573 = vpack.c.bf16 %v541, %v541
      %v574 = vpack.c.bf16 %v542, %v542
      %v575 = vpack.c.bf16 %v543, %v543
      %v576 = vpack.c.bf16 %v544, %v544
      %v577 = vpack.c.bf16 %v545, %v545
      %v578 = vpack.c.bf16 %v546, %v546
      %v579 = vpack.c.bf16 %v547, %v547
      %v580 = vpack.c.bf16 %v548, %v548
      %v581 = vpack.c.bf16 %v549, %v549
      %v582 = vpack.c.bf16 %v550, %v550
      %v583 = vpack.c.bf16 %v551, %v551
      %v584 = vpack.c.bf16 %v552, %v552
      %v585 = vpack.c.bf16 %v553, %v553
      %v586 = vpack.c.bf16 %v554, %v554
      %v587 = vpack.c.bf16 %v555, %v555
      %v588 = vpack.c.bf16 %v556, %v556
      %v589 = vpack.c.bf16 %v557, %v557
      %v590 = vpack.c.bf16 %v558, %v558
      %v591 = vpack.c.bf16 %v559, %v559
      %v592 = vpack.c.bf16 %v560, %v560
      %v593 = vpack.c.bf16 %v561, %v561
      %v594 = vpack.c.bf16 %v562, %v562
      %v595 = vpack.c.bf16 %v563, %v563
      %596 = vst [vmem:[%s199] sm:$0xf] %v564
      %597 = vst [vmem:[%s199 + $0x4] sm:$0xf] %v565
      %598 = vst [vmem:[%s199 + $0x8] sm:$0xf] %v566
      %599 = vst [vmem:[%s199 + $0xc] sm:$0xf] %v567
      %600 = vst [vmem:[%s199 + $0x10] sm:$0xf] %v568
      %601 = vst [vmem:[%s199 + $0x14] sm:$0xf] %v569
      %602 = vst [vmem:[%s199 + $0x18] sm:$0xf] %v570
      %603 = vst [vmem:[%s199 + $0x1c] sm:$0xf] %v571
      %604 = vst [vmem:[%s199 + $0x20] sm:$0xf] %v572
      %605 = vst [vmem:[%s199 + $0x24] sm:$0xf] %v573
      %606 = vst [vmem:[%s199 + $0x28] sm:$0xf] %v574
      %607 = vst [vmem:[%s199 + $0x2c] sm:$0xf] %v575
      %608 = vst [vmem:[%s199 + $0x30] sm:$0xf] %v576
      %609 = vst [vmem:[%s199 + $0x34] sm:$0xf] %v577
      %610 = vst [vmem:[%s199 + $0x38] sm:$0xf] %v578
      %611 = vst [vmem:[%s199 + $0x3c] sm:$0xf] %v579
      %612 = vst [vmem:[%s199 + $0x40] sm:$0xf] %v580
      %613 = vst [vmem:[%s199 + $0x44] sm:$0xf] %v581
      %614 = vst [vmem:[%s199 + $0x48] sm:$0xf] %v582
      %615 = vst [vmem:[%s199 + $0x4c] sm:$0xf] %v583
      %616 = vst [vmem:[%s199 + $0x50] sm:$0xf] %v584
      %617 = vst [vmem:[%s199 + $0x54] sm:$0xf] %v585
      %618 = vst [vmem:[%s199 + $0x58] sm:$0xf] %v586
      %619 = vst [vmem:[%s199 + $0x5c] sm:$0xf] %v587
      %620 = vst [vmem:[%s199 + $0x60] sm:$0xf] %v588
      %621 = vst [vmem:[%s199 + $0x64] sm:$0xf] %v589
      %622 = vst [vmem:[%s199 + $0x68] sm:$0xf] %v590
      %623 = vst [vmem:[%s199 + $0x6c] sm:$0xf] %v591
      %624 = vst [vmem:[%s199 + $0x70] sm:$0xf] %v592
      %625 = vst [vmem:[%s199 + $0x74] sm:$0xf] %v593
      %626 = vst [vmem:[%s199 + $0x78] sm:$0xf] %v594
      %627 = vst [vmem:[%s199 + $0x7c] sm:$0xf] %v595
      %s628 = smul.u32 32, %s15
      %p629 = scmp.lt.s32.totalorder %s628, 63
      %s630 = scalar_select %p629, %s628, 63
      %s631 = smul.addr %s630, 4
      %s632 = scalar_lea.vmem %s4, %s631
      // Predicated region
      $region37: #{decoder_block_forward.3} parent=35 // pred_check
        %p633 = pneg %p122
      $region38: #{decoder_block_forward.3} parent=35 // pred_check_branch
        %635 = sbr.rel (%p633) target = $region40
      $region39: #{decoder_block_forward.3} parent=35 // pred_region
        %s636 = smul.u32 32, %s15
      $region40: #{decoder_block_forward.3} parent=35 // pred_fallthru
        _
    $region36: #{decoder_block_forward.3} parent=5 // pred_fallthru
      _
    %p637 = scmp.le.s32.totalorder 2, %s10
    // Predicated region
    $region41: #{decoder_block_forward.3} parent=5 // pred_check
      %p638 = pneg %p637
    $region42: #{decoder_block_forward.3} parent=5 // pred_check_branch
      %640 = sbr.rel (%p638) target = $region44
    $region43: #{decoder_block_forward.3} parent=5 // pred_region
      %s641 = ssub.s32 %s10, 2
      // Predicated region
      $region45: #{decoder_block_forward.3} parent=43 // pred_check
        %p642 = pneg %p128
      $region46: #{decoder_block_forward.3} parent=43 // pred_check_branch
        %644 = sbr.rel (%p642) target = $region48
      $region47: #{decoder_block_forward.3} parent=43 // pred_region
        %s645 = smul.u32 32, %s16
        %p646 = scmp.lt.s32.totalorder %s645, 63
        %s647 = scalar_select %p646, %s645, 63
        %s648 = smul.addr %s647, 4
        %s649 = scalar_lea.vmem %s4, %s648
      $region48: #{decoder_block_forward.3} parent=43 // pred_fallthru
        _
    $region44: #{decoder_block_forward.3} parent=5 // pred_fallthru
      _
  $region6: #{decoder_block_forward.3} parent=0 // loop_footer
    %s14 = sadd.s32 1, %s10
  $region7: #{decoder_block_forward.3} parent=0 // loop_footer_branch
    %9 = sbr.rel target = $region3
  $region8: #{decoder_block_forward.3} parent=0 // loop_exit
    _

</llo_original>
